<compile_context>
chip_gen: v6e
topology: v6e:2x2x1
jax: 0.10.0
libtpu: 0.0.40
codegen_flags: <defaults>
</compile_context>

<pallas_src>
import jax
import jax.numpy as jnp
from jax.experimental import pallas as pl
from jax.experimental.pallas import tpu as pltpu


def _round_up(x, m):
    return ((x + m - 1) // m) * m


def _critic_mlp_kernel(x_ref, w1_ref, b1_ref, w2_ref, b2_ref, w3_ref, b3_ref,
                       out_ref):
    """One batch-tile of the fused 3-layer MLP.

    Weights arrive already in bf16 (prepared once); the streamed f32 activations
    are cast to bf16 only at the dot inputs and accumulated in f32 on the MXU.
    Bias add / ReLU run in f32 on the VPU (works on all of v5e/v6e/v7x).
    """
    x = x_ref[...].astype(jnp.bfloat16)

    h1 = jnp.dot(x, w1_ref[...], preferred_element_type=jnp.float32)
    h1 = jnp.maximum(h1 + b1_ref[...], 0.0)                      # ReLU (f32)

    h2 = jnp.dot(h1.astype(jnp.bfloat16), w2_ref[...],
                 preferred_element_type=jnp.float32)
    h2 = jnp.maximum(h2 + b2_ref[...], 0.0)                      # ReLU (f32)

    logits = jnp.dot(h2.astype(jnp.bfloat16), w3_ref[...],
                     preferred_element_type=jnp.float32)
    out_ref[...] = (logits + b3_ref[...]).astype(out_ref.dtype)


def prepare_params(params):
    """One-time parameter prep (hoisted out of the per-call path).

    Casts weights to bf16 (MXU-native on v5e/v6e/v7x) and biases to f32 row
    vectors (1, N). Call once, reuse the result for every forward.
    """
    f32, bf16 = jnp.float32, jnp.bfloat16
    h_dim = params["w1"].shape[1]
    d_out = params["w3"].shape[1]
    return {
        "w1": params["w1"].astype(bf16),
        "b1": params["b1"].astype(f32).reshape(1, h_dim),
        "w2": params["w2"].astype(bf16),
        "b2": params["b2"].astype(f32).reshape(1, h_dim),
        "w3": params["w3"].astype(bf16),
        "b3": params["b3"].astype(f32).reshape(1, d_out),
    }


def simple_critic_forward(embedding, prepared, *, b_tile=128):
    """SimpleCritic (Discrete) forward on TPU via Pallas.

    embedding: (B, D_in) float32
    prepared:  output of prepare_params()
    returns:   (B, D_out) float32 logits

    b_tile: batch-tile rows (multiple of 8). Default 128 gives >=2 grid steps
    at B>=136 (keeps both v7x cores busy); on single-TC v5e/v6e with large B,
    sweep 256-1024 to amortize per-grid-step overhead.
    """
    B, d_in = embedding.shape
    h_dim = prepared["w1"].shape[1]
    d_out = prepared["w3"].shape[1]

    b_tile = min(b_tile, _round_up(B, 8))
    grid = (pl.cdiv(B, b_tile),)

    # Weights/biases: constant index_map -> resident in VMEM across grid steps.
    # Embedding/output: indexed by the batch grid -> double-buffered streaming.
    # Last-dim-of-block == full array dim is legal even when < 128 lanes
    # (d_in = 64, d_out = 8), so no padding passes are needed.
    in_specs = [
        pl.BlockSpec((b_tile, d_in), lambda i: (i, 0)),     # x tile (streamed)
        pl.BlockSpec((d_in, h_dim), lambda i: (0, 0)),      # w1 (resident)
        pl.BlockSpec((1, h_dim), lambda i: (0, 0)),         # b1
        pl.BlockSpec((h_dim, h_dim), lambda i: (0, 0)),     # w2
        pl.BlockSpec((1, h_dim), lambda i: (0, 0)),         # b2
        pl.BlockSpec((h_dim, d_out), lambda i: (0, 0)),     # w3
        pl.BlockSpec((1, d_out), lambda i: (0, 0)),         # b3
    ]
    out_spec = pl.BlockSpec((b_tile, d_out), lambda i: (i, 0))

    flops = 2 * B * (d_in * h_dim + h_dim * h_dim + h_dim * d_out)
    bytes_accessed = (
        B * d_in * 4                                             # x (f32)
        + (d_in * h_dim + h_dim * h_dim + h_dim * d_out) * 2     # weights (bf16)
        + (2 * h_dim + d_out) * 4                                # biases (f32)
        + B * d_out * 4                                          # out (f32)
    )

    return pl.pallas_call(
        _critic_mlp_kernel,
        out_shape=jax.ShapeDtypeStruct((B, d_out), jnp.float32),
        grid=grid,
        in_specs=in_specs,
        out_specs=out_spec,
        cost_estimate=pl.CostEstimate(
            flops=flops, transcendentals=0, bytes_accessed=bytes_accessed),
        compiler_params=pltpu.CompilerParams(
            # Batch tiles are independent -> shard across TensorCores on v7x.
            dimension_semantics=("parallel",),
        ),
    )(embedding, prepared["w1"], prepared["b1"], prepared["w2"],
      prepared["b2"], prepared["w3"], prepared["b3"])


def init_params(key, input_dim, hidden_dim, output_dim):
    """Deterministic synthetic init matching the module's parameter shapes."""
    k1, k2, k3 = jax.random.split(key, 3)
    s1 = 1.0 / jnp.sqrt(input_dim)
    s2 = 1.0 / jnp.sqrt(hidden_dim)
    return {
        "w1": jax.random.uniform(k1, (input_dim, hidden_dim), jnp.float32, -s1, s1),
        "b1": jnp.zeros((1, hidden_dim), jnp.float32),
        "w2": jax.random.uniform(k2, (hidden_dim, hidden_dim), jnp.float32, -s2, s2),
        "b2": jnp.zeros((1, hidden_dim), jnp.float32),
        # last layer: w_init_std = 0.01 (as in utils.mlp for Discrete)
        "w3": 0.01 * jax.random.normal(k3, (hidden_dim, output_dim), jnp.float32),
        "b3": jnp.zeros((1, output_dim), jnp.float32),
    }


def _reference_forward(embedding, p, matmul_dtype=jnp.float32):
    """Pure-JAX reference; matmul_dtype mirrors the kernel's bf16 MXU inputs."""
    def dense(x, w, b):
        y = jnp.dot(x.astype(matmul_dtype), w.astype(matmul_dtype),
                    preferred_element_type=jnp.float32)
        return y + b.reshape(1, -1)
    h = jnp.maximum(dense(embedding, p["w1"], p["b1"]), 0.0)
    h = jnp.maximum(dense(h, p["w2"], p["b2"]), 0.0)
    return dense(h, p["w3"], p["b3"])


if __name__ == "__main__":
    # SimpleCritic(input_dim=64, output_dim=8, action_type='Discrete',
    #              hidden_depth=2, hidden_dim=128); batch chosen to exercise
    # both the batch grid (2 tiles) and the partial edge tile (200 % 128 != 0).
    B, D_IN, H, D_OUT = 200, 64, 128, 8

    key = jax.random.PRNGKey(0)
    k_emb, k_par = jax.random.split(key)

    embedding = jax.random.normal(k_emb, (B, D_IN), jnp.float32)
    params = init_params(k_par, D_IN, H, D_OUT)

    # One-time prep (bf16 weight casts / bias reshapes) -- NOT in the per-call path.
    prepared = prepare_params(params)
    prepared = jax.tree_util.tree_map(jax.block_until_ready, prepared)

    out = jax.block_until_ready(simple_critic_forward(embedding, prepared))

    ref_bf16 = _reference_forward(embedding, params, matmul_dtype=jnp.bfloat16)
    ref_f32 = _reference_forward(embedding, params, matmul_dtype=jnp.float32)

    assert out.shape == (B, D_OUT)
    # tight check against the bf16-matmul / f32-accumulate reference
    assert jnp.allclose(out, ref_bf16, atol=2e-3, rtol=2e-3)
    # loose check against the pure-f32 module semantics
    assert jnp.allclose(out, ref_f32, atol=5e-2, rtol=5e-2)

    print("KERNEL_OK")
</pallas_src>

<mosaic_0001>
module attributes {stable_mosaic.version = 11 : i64} {
  func.func @_critic_mlp_kernel(%arg0: i32, %arg1: memref<128x64xf32, #tpu.memory_space<vmem>>, %arg2: memref<64x128xbf16, #tpu.memory_space<vmem>>, %arg3: memref<1x128xf32, #tpu.memory_space<vmem>>, %arg4: memref<128x128xbf16, #tpu.memory_space<vmem>>, %arg5: memref<1x128xf32, #tpu.memory_space<vmem>>, %arg6: memref<128x8xbf16, #tpu.memory_space<vmem>>, %arg7: memref<1x8xf32, #tpu.memory_space<vmem>>, %arg8: memref<128x8xf32, #tpu.memory_space<vmem>>) attributes {dimension_semantics = [#tpu.dimension_semantics<parallel>], iteration_bounds = array<i64: 2>, scalar_prefetch = 0 : i64, scratch_operands = 0 : i64, tpu.core_type = #tpu.core_type<tc>, window_params = [{transform_indices = @transform_0, window_bounds = array<i64: 128, 64>}, {pipeline_mode = #tpu.pipeline_mode<synchronous>, transform_indices = @transform_1, window_bounds = array<i64: 64, 128>}, {pipeline_mode = #tpu.pipeline_mode<synchronous>, transform_indices = @transform_2, window_bounds = array<i64: 1, 128>}, {pipeline_mode = #tpu.pipeline_mode<synchronous>, transform_indices = @transform_3, window_bounds = array<i64: 128, 128>}, {pipeline_mode = #tpu.pipeline_mode<synchronous>, transform_indices = @transform_4, window_bounds = array<i64: 1, 128>}, {pipeline_mode = #tpu.pipeline_mode<synchronous>, transform_indices = @transform_5, window_bounds = array<i64: 128, 8>}, {pipeline_mode = #tpu.pipeline_mode<synchronous>, transform_indices = @transform_6, window_bounds = array<i64: 1, 8>}, {transform_indices = @transform_7, window_bounds = array<i64: 128, 8>}]} {
    %c0 = arith.constant 0 : index
    %c0_0 = arith.constant 0 : index
    %0 = vector.load %arg1[%c0, %c0_0] : memref<128x64xf32, #tpu.memory_space<vmem>>, vector<128x64xf32>
    %1 = arith.truncf %0 : vector<128x64xf32> to vector<128x64xbf16>
    %c0_1 = arith.constant 0 : index
    %c0_2 = arith.constant 0 : index
    %2 = vector.load %arg2[%c0_1, %c0_2] : memref<64x128xbf16, #tpu.memory_space<vmem>>, vector<64x128xbf16>
    %cst = arith.constant dense<0.000000e+00> : vector<128x128xf32>
    %3 = tpu.matmul %1, %2, %cst {dimension_numbers = #tpu.dot_dimension_numbers<[1], [0], [0], [1], [0, 0, 1, 1], [], []>} : vector<128x64xbf16>, vector<64x128xbf16>, vector<128x128xf32> -> vector<128x128xf32>
    %c0_3 = arith.constant 0 : index
    %c0_4 = arith.constant 0 : index
    %4 = vector.load %arg3[%c0_3, %c0_4] : memref<1x128xf32, #tpu.memory_space<vmem>>, vector<1x128xf32>
    %5 = vector.broadcast %4 : vector<1x128xf32> to vector<128x128xf32>
    %6 = arith.addf %3, %5 : vector<128x128xf32>
    %cst_5 = arith.constant 0.000000e+00 : f32
    %7 = vector.broadcast %cst_5 : f32 to vector<128x128xf32>
    %8 = arith.maximumf %6, %7 : vector<128x128xf32>
    %9 = arith.truncf %8 : vector<128x128xf32> to vector<128x128xbf16>
    %c0_6 = arith.constant 0 : index
    %c0_7 = arith.constant 0 : index
    %10 = vector.load %arg4[%c0_6, %c0_7] : memref<128x128xbf16, #tpu.memory_space<vmem>>, vector<128x128xbf16>
    %cst_8 = arith.constant dense<0.000000e+00> : vector<128x128xf32>
    %11 = tpu.matmul %9, %10, %cst_8 {dimension_numbers = #tpu.dot_dimension_numbers<[1], [0], [0], [1], [0, 0, 1, 1], [], []>} : vector<128x128xbf16>, vector<128x128xbf16>, vector<128x128xf32> -> vector<128x128xf32>
    %c0_9 = arith.constant 0 : index
    %c0_10 = arith.constant 0 : index
    %12 = vector.load %arg5[%c0_9, %c0_10] : memref<1x128xf32, #tpu.memory_space<vmem>>, vector<1x128xf32>
    %13 = vector.broadcast %12 : vector<1x128xf32> to vector<128x128xf32>
    %14 = arith.addf %11, %13 : vector<128x128xf32>
    %cst_11 = arith.constant 0.000000e+00 : f32
    %15 = vector.broadcast %cst_11 : f32 to vector<128x128xf32>
    %16 = arith.maximumf %14, %15 : vector<128x128xf32>
    %17 = arith.truncf %16 : vector<128x128xf32> to vector<128x128xbf16>
    %c0_12 = arith.constant 0 : index
    %c0_13 = arith.constant 0 : index
    %18 = vector.load %arg6[%c0_12, %c0_13] : memref<128x8xbf16, #tpu.memory_space<vmem>>, vector<128x8xbf16>
    %cst_14 = arith.constant dense<0.000000e+00> : vector<128x8xf32>
    %19 = tpu.matmul %17, %18, %cst_14 {dimension_numbers = #tpu.dot_dimension_numbers<[1], [0], [0], [1], [0, 0, 1, 1], [], []>} : vector<128x128xbf16>, vector<128x8xbf16>, vector<128x8xf32> -> vector<128x8xf32>
    %c0_15 = arith.constant 0 : index
    %c0_16 = arith.constant 0 : index
    %20 = vector.load %arg7[%c0_15, %c0_16] : memref<1x8xf32, #tpu.memory_space<vmem>>, vector<1x8xf32>
    %21 = vector.broadcast %20 : vector<1x8xf32> to vector<128x8xf32>
    %22 = arith.addf %19, %21 : vector<128x8xf32>
    %c0_17 = arith.constant 0 : index
    %c0_18 = arith.constant 0 : index
    %23 = vector.load %arg8[%c0_17, %c0_18] : memref<128x8xf32, #tpu.memory_space<vmem>>, vector<128x8xf32>
    tpu.vector_store %arg8[%c0_17, %c0_18], %22 {strides = array<i32>} : memref<128x8xf32, #tpu.memory_space<vmem>>, vector<128x8xf32>,
    return
  }
  func.func @transform_0(%arg0: i32) -> (i32, i32) {
    %c0_i32 = arith.constant 0 : i32
    %c0_i32_0 = arith.constant 0 : i32
    return %arg0, %c0_i32 : i32, i32
  }
  func.func @transform_1(%arg0: i32) -> (i32, i32) {
    %c0_i32 = arith.constant 0 : i32
    %c0_i32_0 = arith.constant 0 : i32
    %c0_i32_1 = arith.constant 0 : i32
    return %c0_i32, %c0_i32_0 : i32, i32
  }
  func.func @transform_2(%arg0: i32) -> (i32, i32) {
    %c0_i32 = arith.constant 0 : i32
    %c0_i32_0 = arith.constant 0 : i32
    %c0_i32_1 = arith.constant 0 : i32
    return %c0_i32, %c0_i32_0 : i32, i32
  }
  func.func @transform_3(%arg0: i32) -> (i32, i32) {
    %c0_i32 = arith.constant 0 : i32
    %c0_i32_0 = arith.constant 0 : i32
    %c0_i32_1 = arith.constant 0 : i32
    return %c0_i32, %c0_i32_0 : i32, i32
  }
  func.func @transform_4(%arg0: i32) -> (i32, i32) {
    %c0_i32 = arith.constant 0 : i32
    %c0_i32_0 = arith.constant 0 : i32
    %c0_i32_1 = arith.constant 0 : i32
    return %c0_i32, %c0_i32_0 : i32, i32
  }
  func.func @transform_5(%arg0: i32) -> (i32, i32) {
    %c0_i32 = arith.constant 0 : i32
    %c0_i32_0 = arith.constant 0 : i32
    %c0_i32_1 = arith.constant 0 : i32
    return %c0_i32, %c0_i32_0 : i32, i32
  }
  func.func @transform_6(%arg0: i32) -> (i32, i32) {
    %c0_i32 = arith.constant 0 : i32
    %c0_i32_0 = arith.constant 0 : i32
    %c0_i32_1 = arith.constant 0 : i32
    return %c0_i32, %c0_i32_0 : i32, i32
  }
  func.func @transform_7(%arg0: i32) -> (i32, i32) {
    %c0_i32 = arith.constant 0 : i32
    %c0_i32_0 = arith.constant 0 : i32
    return %arg0, %c0_i32 : i32, i32
  }
}

</mosaic_0001>

<llo_original>
// kernel: tpu_custom_call.1
$region0: #{tpu_custom_call.1}
  #allocation0 [shape = 'u32[]', space=smem, size = 0x4, offset = 0x4, fixed_abs, tag = 'smem constant byte address 0x4 - core index']
  #allocation1 [shape = 'u32[144,128]{1,0:T(1,128)}', space=vmem, size = 0x12000, scoped, tag = 'internal scratch']
  %s0 = inlined_call_operand.vmem [shape: f32[200,64], index: 0, kind: input, shape index: {}]
  %s1 = inlined_call_operand.vmem [shape: bf16[64,128], index: 1, kind: input, shape index: {}]
  %s2 = inlined_call_operand.vmem [shape: f32[1,128], index: 2, kind: input, shape index: {}]
  %s3 = inlined_call_operand.vmem [shape: bf16[128,128], index: 3, kind: input, shape index: {}]
  %s4 = inlined_call_operand.vmem [shape: f32[1,128], index: 4, kind: input, shape index: {}]
  %s5 = inlined_call_operand.vmem [shape: bf16[128,8], index: 5, kind: input, shape index: {}]
  %s6 = inlined_call_operand.vmem [shape: f32[1,8], index: 6, kind: input, shape index: {}]
  %s7 = inlined_call_operand.vmem [shape: f32[200,8], index: 7, kind: output, shape index: {}]
  %s8 = sld [smem:[#allocation0]]
  $region109: #{tpu_custom_call.1} parent=0
    _
  %s10 = ssub.s32 1, %s8
  %s11 = scalar_select 0, %s10, %s8
  $region1: #{tpu_custom_call.1} parent=0
    #allocation2 [shape = 'u8[131072]{0}', space=vmem, size = 0x20000, scoped, tag = 'output window, operand 0']
    loop: start=0, step=1, limit=4
    $region2: #{tpu_custom_call.1} parent=1 // loop_pre_header
      _
    $region3: #{tpu_custom_call.1} parent=1 // loop_header
      %s13 = sphi 0, %s17
      %p14 = scmp.ge.s32.totalorder %s13, 4
      %s23 = sphi 0, %s25
      %s26 = sphi 0, %s23
      %s27 = sphi 0, %s26
      %s43 = sphi 0, %s27
      %s47 = sphi 0, %s47
      %s49 = sphi 0, %s47
      %s50 = sphi 0, %s49
      %s64 = sphi 0, %s50
      %s68 = sphi 0, %s68
      %s70 = sphi 0, %s68
      %s71 = sphi 0, %s70
      %s85 = sphi 0, %s71
      %s89 = sphi 0, %s89
      %s91 = sphi 0, %s89
      %s92 = sphi 0, %s91
      %s106 = sphi 0, %s92
      %s110 = sphi 0, %s110
      %s112 = sphi 0, %s110
      %s113 = sphi 0, %s112
      %s127 = sphi 0, %s113
      %s131 = sphi 0, %s131
      %s133 = sphi 0, %s131
      %s134 = sphi 0, %s133
      %s148 = sphi 0, %s134
      %s152 = sphi 0, %s152
      %s154 = sphi 0, %s152
      %s155 = sphi 0, %s154
      %s169 = sphi 0, %s155
      %s175 = sphi 0, %s177
      %s178 = sphi 0, %s175
      %s179 = sphi 0, %s178
      %s195 = sphi 0, %s179
    $region4: #{tpu_custom_call.1} parent=1 // loop_header_branch
      %16 = sbr.rel (%p14) target = $region8
    $region5: #{tpu_custom_call.1} parent=1 // loop_body
      %s18 = ssub.s32 %s13, 1
      %s19 = ssub.s32 %s13, 2
      %s20 = sadd.s32 %s13, 1
      %s21 = ssub.s32 %s13, %s20
      %p22 = scmp.eq.s32.totalorder %s21, 0
      %s24 = sadd.s32 %s23, 1
      %s25 = scalar_select %p22, %s23, %s24
      %p28 = pneg %p22
      %p29 = scmp.eq.s32.totalorder %s13, 1
      %p30 = por %p28, %p29
      %p31 = scmp.ne.s32.totalorder %s23, %s26
      %p32 = scmp.eq.s32.totalorder %s13, 0
      %p33 = por %p31, %p32
      %p34 = scmp.ne.s32.totalorder %s23, %s26
      %p35 = scmp.eq.s32.totalorder %s18, 1
      %p36 = por %p34, %p35
      %p37 = scmp.ne.s32.totalorder %s26, %s27
      %p38 = scmp.eq.s32.totalorder %s18, 0
      %p39 = por %p37, %p38
      %p40 = scmp.ne.s32.totalorder %s26, %s27
      %p41 = scmp.eq.s32.totalorder %s19, 1
      %p42 = por %p40, %p41
      %p44 = scmp.ne.s32.totalorder %s27, %s43
      %p45 = scmp.eq.s32.totalorder %s19, 0
      %p46 = por %p44, %p45
      %s48 = sadd.s32 %s47, 1
      %p51 = scmp.eq.s32.totalorder %s13, 1
      %p52 = scmp.ne.s32.totalorder %s47, %s49
      %p53 = scmp.eq.s32.totalorder %s13, 0
      %p54 = por %p52, %p53
      %p55 = scmp.ne.s32.totalorder %s47, %s49
      %p56 = scmp.eq.s32.totalorder %s18, 1
      %p57 = por %p55, %p56
      %p58 = scmp.ne.s32.totalorder %s49, %s50
      %p59 = scmp.eq.s32.totalorder %s18, 0
      %p60 = por %p58, %p59
      %p61 = scmp.ne.s32.totalorder %s49, %s50
      %p62 = scmp.eq.s32.totalorder %s19, 1
      %p63 = por %p61, %p62
      %p65 = scmp.ne.s32.totalorder %s50, %s64
      %p66 = scmp.eq.s32.totalorder %s19, 0
      %p67 = por %p65, %p66
      %s69 = sadd.s32 %s68, 1
      %p72 = scmp.eq.s32.totalorder %s13, 1
      %p73 = scmp.ne.s32.totalorder %s68, %s70
      %p74 = scmp.eq.s32.totalorder %s13, 0
      %p75 = por %p73, %p74
      %p76 = scmp.ne.s32.totalorder %s68, %s70
      %p77 = scmp.eq.s32.totalorder %s18, 1
      %p78 = por %p76, %p77
      %p79 = scmp.ne.s32.totalorder %s70, %s71
      %p80 = scmp.eq.s32.totalorder %s18, 0
      %p81 = por %p79, %p80
      %p82 = scmp.ne.s32.totalorder %s70, %s71
      %p83 = scmp.eq.s32.totalorder %s19, 1
      %p84 = por %p82, %p83
      %p86 = scmp.ne.s32.totalorder %s71, %s85
      %p87 = scmp.eq.s32.totalorder %s19, 0
      %p88 = por %p86, %p87
      %s90 = sadd.s32 %s89, 1
      %p93 = scmp.eq.s32.totalorder %s13, 1
      %p94 = scmp.ne.s32.totalorder %s89, %s91
      %p95 = scmp.eq.s32.totalorder %s13, 0
      %p96 = por %p94, %p95
      %p97 = scmp.ne.s32.totalorder %s89, %s91
      %p98 = scmp.eq.s32.totalorder %s18, 1
      %p99 = por %p97, %p98
      %p100 = scmp.ne.s32.totalorder %s91, %s92
      %p101 = scmp.eq.s32.totalorder %s18, 0
      %p102 = por %p100, %p101
      %p103 = scmp.ne.s32.totalorder %s91, %s92
      %p104 = scmp.eq.s32.totalorder %s19, 1
      %p105 = por %p103, %p104
      %p107 = scmp.ne.s32.totalorder %s92, %s106
      %p108 = scmp.eq.s32.totalorder %s19, 0
      %p109 = por %p107, %p108
      %s111 = sadd.s32 %s110, 1
      %p114 = scmp.eq.s32.totalorder %s13, 1
      %p115 = scmp.ne.s32.totalorder %s110, %s112
      %p116 = scmp.eq.s32.totalorder %s13, 0
      %p117 = por %p115, %p116
      %p118 = scmp.ne.s32.totalorder %s110, %s112
      %p119 = scmp.eq.s32.totalorder %s18, 1
      %p120 = por %p118, %p119
      %p121 = scmp.ne.s32.totalorder %s112, %s113
      %p122 = scmp.eq.s32.totalorder %s18, 0
      %p123 = por %p121, %p122
      %p124 = scmp.ne.s32.totalorder %s112, %s113
      %p125 = scmp.eq.s32.totalorder %s19, 1
      %p126 = por %p124, %p125
      %p128 = scmp.ne.s32.totalorder %s113, %s127
      %p129 = scmp.eq.s32.totalorder %s19, 0
      %p130 = por %p128, %p129
      %s132 = sadd.s32 %s131, 1
      %p135 = scmp.eq.s32.totalorder %s13, 1
      %p136 = scmp.ne.s32.totalorder %s131, %s133
      %p137 = scmp.eq.s32.totalorder %s13, 0
      %p138 = por %p136, %p137
      %p139 = scmp.ne.s32.totalorder %s131, %s133
      %p140 = scmp.eq.s32.totalorder %s18, 1
      %p141 = por %p139, %p140
      %p142 = scmp.ne.s32.totalorder %s133, %s134
      %p143 = scmp.eq.s32.totalorder %s18, 0
      %p144 = por %p142, %p143
      %p145 = scmp.ne.s32.totalorder %s133, %s134
      %p146 = scmp.eq.s32.totalorder %s19, 1
      %p147 = por %p145, %p146
      %p149 = scmp.ne.s32.totalorder %s134, %s148
      %p150 = scmp.eq.s32.totalorder %s19, 0
      %p151 = por %p149, %p150
      %s153 = sadd.s32 %s152, 1
      %p156 = scmp.eq.s32.totalorder %s13, 1
      %p157 = scmp.ne.s32.totalorder %s152, %s154
      %p158 = scmp.eq.s32.totalorder %s13, 0
      %p159 = por %p157, %p158
      %p160 = scmp.ne.s32.totalorder %s152, %s154
      %p161 = scmp.eq.s32.totalorder %s18, 1
      %p162 = por %p160, %p161
      %p163 = scmp.ne.s32.totalorder %s154, %s155
      %p164 = scmp.eq.s32.totalorder %s18, 0
      %p165 = por %p163, %p164
      %p166 = scmp.ne.s32.totalorder %s154, %s155
      %p167 = scmp.eq.s32.totalorder %s19, 1
      %p168 = por %p166, %p167
      %p170 = scmp.ne.s32.totalorder %s155, %s169
      %p171 = scmp.eq.s32.totalorder %s19, 0
      %p172 = por %p170, %p171
      %s173 = ssub.s32 %s13, %s20
      %p174 = scmp.eq.s32.totalorder %s173, 0
      %s176 = sadd.s32 %s175, 1
      %s177 = scalar_select %p174, %s175, %s176
      %p180 = pneg %p174
      %p181 = scmp.eq.s32.totalorder %s13, 1
      %p182 = por %p180, %p181
      %p183 = scmp.ne.s32.totalorder %s175, %s178
      %p184 = scmp.eq.s32.totalorder %s13, 0
      %p185 = por %p183, %p184
      %p186 = scmp.ne.s32.totalorder %s175, %s178
      %p187 = scmp.eq.s32.totalorder %s18, 1
      %p188 = por %p186, %p187
      %p189 = scmp.ne.s32.totalorder %s178, %s179
      %p190 = scmp.eq.s32.totalorder %s18, 0
      %p191 = por %p189, %p190
      %p192 = scmp.ne.s32.totalorder %s178, %s179
      %p193 = scmp.eq.s32.totalorder %s19, 1
      %p194 = por %p192, %p193
      %p196 = scmp.ne.s32.totalorder %s179, %s195
      %p197 = scmp.eq.s32.totalorder %s19, 0
      %p198 = por %p196, %p197
      %p199 = scmp.le.s32.totalorder 1, %s13
      %p200 = scmp.lt.s32.totalorder %s13, 3
      %p201 = pnand %p199, %p200
      %p202 = pneg %p201
      // Predicated region
      $region9: #{tpu_custom_call.1} parent=5 // pred_check
        _
      $region10: #{tpu_custom_call.1} parent=5 // pred_check_branch
        %204 = sbr.rel (%p201) target = $region12
      $region11: #{tpu_custom_call.1} parent=5 // pred_region
        %s205 = ssub.s32 %s13, 1
        // Predicated region
        $region13: #{tpu_custom_call.1} parent=11 // pred_check
          %p206 = pneg %p60
        $region14: #{tpu_custom_call.1} parent=11 // pred_check_branch
          %208 = sbr.rel (%p206) target = $region16
        $region15: #{tpu_custom_call.1} parent=11 // pred_region
          _
        $region16: #{tpu_custom_call.1} parent=11 // pred_fallthru
          _
        // Predicated region
        $region17: #{tpu_custom_call.1} parent=11 // pred_check
          %p209 = pneg %p81
        $region18: #{tpu_custom_call.1} parent=11 // pred_check_branch
          %211 = sbr.rel (%p209) target = $region20
        $region19: #{tpu_custom_call.1} parent=11 // pred_region
          _
        $region20: #{tpu_custom_call.1} parent=11 // pred_fallthru
          _
        // Predicated region
        $region21: #{tpu_custom_call.1} parent=11 // pred_check
          %p212 = pneg %p102
        $region22: #{tpu_custom_call.1} parent=11 // pred_check_branch
          %214 = sbr.rel (%p212) target = $region24
        $region23: #{tpu_custom_call.1} parent=11 // pred_region
          _
        $region24: #{tpu_custom_call.1} parent=11 // pred_fallthru
          _
        // Predicated region
        $region25: #{tpu_custom_call.1} parent=11 // pred_check
          %p215 = pneg %p123
        $region26: #{tpu_custom_call.1} parent=11 // pred_check_branch
          %217 = sbr.rel (%p215) target = $region28
        $region27: #{tpu_custom_call.1} parent=11 // pred_region
          _
        $region28: #{tpu_custom_call.1} parent=11 // pred_fallthru
          _
        // Predicated region
        $region29: #{tpu_custom_call.1} parent=11 // pred_check
          %p218 = pneg %p144
        $region30: #{tpu_custom_call.1} parent=11 // pred_check_branch
          %220 = sbr.rel (%p218) target = $region32
        $region31: #{tpu_custom_call.1} parent=11 // pred_region
          _
        $region32: #{tpu_custom_call.1} parent=11 // pred_fallthru
          _
        // Predicated region
        $region33: #{tpu_custom_call.1} parent=11 // pred_check
          %p221 = pneg %p165
        $region34: #{tpu_custom_call.1} parent=11 // pred_check_branch
          %223 = sbr.rel (%p221) target = $region36
        $region35: #{tpu_custom_call.1} parent=11 // pred_region
          _
        $region36: #{tpu_custom_call.1} parent=11 // pred_fallthru
          _
      $region12: #{tpu_custom_call.1} parent=5 // pred_fallthru
        _
      %p224 = scmp.lt.s32.totalorder %s13, 2
      // Predicated region
      $region37: #{tpu_custom_call.1} parent=5 // pred_check
        %p225 = pneg %p224
      $region38: #{tpu_custom_call.1} parent=5 // pred_check_branch
        %227 = sbr.rel (%p225) target = $region40
      $region39: #{tpu_custom_call.1} parent=5 // pred_region
        // Predicated region
        $region41: #{tpu_custom_call.1} parent=39 // pred_check
          %p228 = pneg %p33
        $region42: #{tpu_custom_call.1} parent=39 // pred_check_branch
          %230 = sbr.rel (%p228) target = $region44
        $region43: #{tpu_custom_call.1} parent=39 // pred_region
          %s231 = smul.u32 16, %s13
          %s232 = ssub.s32 25, %s231
          %p233 = scmp.lt.s32.totalorder %s232, 16
          %s234 = scalar_select %p233, %s232, 16
          %s235 = smul.u32 128, %s234
          %p236 = scmp.lt.s32.totalorder %s231, 24
          %s237 = scalar_select %p236, %s231, 24
          %s238 = smul.addr %s237, 8
          %s239 = scalar_lea.vmem %s0, %s238
          %s240 = smul.u32 16, %s13
          %s241 = ssub.s32 25, %s240
          %p242 = scmp.lt.s32.totalorder %s241, 16
          %s243 = scalar_select %p242, %s241, 16
          %s244 = smul.u32 128, %s243
        $region44: #{tpu_custom_call.1} parent=39 // pred_fallthru
          _
      $region40: #{tpu_custom_call.1} parent=5 // pred_fallthru
        _
      %p245 = scmp.le.s32.totalorder 1, %s13
      %p246 = scmp.lt.s32.totalorder %s13, 3
      %p247 = pnand %p245, %p246
      %p248 = pneg %p247
      // Predicated region
      $region45: #{tpu_custom_call.1} parent=5 // pred_check
        _
      $region46: #{tpu_custom_call.1} parent=5 // pred_check_branch
        %250 = sbr.rel (%p247) target = $region48
      $region47: #{tpu_custom_call.1} parent=5 // pred_region
        %s251 = ssub.s32 %s13, 1
        %s252 = smul.u32 16, %s18
        %s253 = ssub.s32 25, %s252
        %p254 = scmp.lt.s32.totalorder %s253, 16
        %s255 = scalar_select %p254, %s253, 16
        %s256 = smul.u32 128, %s255
        %p257 = scmp.lt.s32.totalorder %s252, 24
        %s258 = scalar_select %p257, %s252, 24
        %s259 = smul.addr %s258, 8
        %s260 = scalar_lea.vmem %s0, %s259
        %p261 = pneg %p39
        %p262 = pneg %p36
        %p263 = pneg %p60
        %p264 = pneg %p57
        %p265 = pneg %p81
        %p266 = pneg %p78
        %p267 = pneg %p102
        %p268 = pneg %p99
        %p269 = pneg %p123
        %p270 = pneg %p120
        %p271 = pneg %p144
        %p272 = pneg %p141
        %p273 = pneg %p165
        %p274 = pneg %p162
        %p275 = pneg %p191
        %p276 = pneg %p188
        %s277 = sand.u32 %s178, 1
        %s278 = sand.u32 %s178, 1
        %s279 = smul.addr %s278, 128
        %s280 = scalar_lea.vmem [#allocation2], %s279
        %s281 = smul.u32 16, %s18
        %s282 = ssub.s32 25, %s281
        %p283 = scmp.lt.s32.totalorder %s282, 16
        %s284 = scalar_select %p283, %s282, 16
        %s285 = smul.u32 128, %s284
        %p286 = scmp.lt.s32.totalorder %s281, 24
        %s287 = scalar_select %p286, %s281, 24
        %s288 = smul.addr %s287, 8
        %s289 = scalar_lea.vmem %s0, %s288
        %s290 = smul.u32 16, %s18
        %s291 = ssub.s32 25, %s290
        %p292 = scmp.lt.s32.totalorder %s291, 16
        %s293 = scalar_select %p292, %s291, 16
        %s294 = smul.u32 128, %s293
        %s295 = smul.u32 16, %s18
        %s296 = ssub.s32 25, %s295
        %p297 = scmp.lt.s32.totalorder %s296, 16
        %s298 = scalar_select %p297, %s296, 16
        %s299 = smul.u32 128, %s298
        %v301 = vld [vmem:[%s289] sm:$0xff]
        %v302 = vld [vmem:[%s289 + $0x8] sm:$0xff]
        %v303 = vld [vmem:[%s289 + $0x10] sm:$0xff]
        %v304 = vld [vmem:[%s289 + $0x18] sm:$0xff]
        %v305 = vld [vmem:[%s289 + $0x20] sm:$0xff]
        %v306 = vld [vmem:[%s289 + $0x28] sm:$0xff]
        %v307 = vld [vmem:[%s289 + $0x30] sm:$0xff]
        %v308 = vld [vmem:[%s289 + $0x38] sm:$0xff]
        %v309 = vld [vmem:[%s289 + $0x40] sm:$0xff]
        %v310 = vld [vmem:[%s289 + $0x48] sm:$0xff]
        %v311 = vld [vmem:[%s289 + $0x50] sm:$0xff]
        %v312 = vld [vmem:[%s289 + $0x58] sm:$0xff]
        %v313 = vld [vmem:[%s289 + $0x60] sm:$0xff]
        %v314 = vld [vmem:[%s289 + $0x68] sm:$0xff]
        %v315 = vld [vmem:[%s289 + $0x70] sm:$0xff]
        %v316 = vld [vmem:[%s289 + $0x78] sm:$0xff]
        %v317 = vpack.c.bf16 %v302, %v301
        %v318 = vpack.c.bf16 %v304, %v303
        %v319 = vpack.c.bf16 %v306, %v305
        %v320 = vpack.c.bf16 %v308, %v307
        %v321 = vpack.c.bf16 %v310, %v309
        %v322 = vpack.c.bf16 %v312, %v311
        %v323 = vpack.c.bf16 %v314, %v313
        %v324 = vpack.c.bf16 %v316, %v315
        %v325 = vld [vmem:[%s1] sm:$0xf]
        %v326 = vld [vmem:[%s1 + $0x4] sm:$0xf]
        %v327 = vld [vmem:[%s1 + $0x8] sm:$0xf]
        %v328 = vld [vmem:[%s1 + $0xc] sm:$0xf]
        %v329 = vld [vmem:[%s1 + $0x10] sm:$0xf]
        %v330 = vld [vmem:[%s1 + $0x14] sm:$0xf]
        %v331 = vld [vmem:[%s1 + $0x18] sm:$0xf]
        %v332 = vld [vmem:[%s1 + $0x1c] sm:$0xf]
        %v333 = vld [vmem:[%s2] sm:$0x1]
        %v335 = vlaneseq
        %v336 = vshrl.u32 %v335, 7
        %v337 = vsub.s32 0, %v336
        %v338 = vrot.slane %v333, %v337
        %v348 = vunpack.c.l.b16 %v325
        %v349 = vunpack.c.l.b16 %v326
        %v350 = vunpack.c.l.b16 %v327
        %v351 = vunpack.c.l.b16 %v328
        %v352 = vunpack.c.l.b16 %v329
        %v353 = vunpack.c.l.b16 %v330
        %v354 = vunpack.c.l.b16 %v331
        %v355 = vunpack.c.l.b16 %v332
        %v356 = vpack.c.b16 %v349, %v348
        %v357 = vpack.c.b16 %v351, %v350
        %v358 = vpack.c.b16 %v353, %v352
        %v359 = vpack.c.b16 %v355, %v354
        %vm364 = vcmask 523264
        %v366 = vsel %vm364, %v317, 0
        %v369 = vsel %vm364, %v318, 0
        %v372 = vsel %vm364, %v319, 0
        %v375 = vsel %vm364, %v320, 0
        %v378 = vsel %vm364, %v321, 0
        %v381 = vsel %vm364, %v322, 0
        %v384 = vsel %vm364, %v323, 0
        %v387 = vsel %vm364, %v324, 0
        %389 = vmatprep.subr.bf16.mxu0 0
        %390 = vmatpush1.bf16.msra.mxu0 0
        %391 = vmatprep.subr.bf16.mxu0 0
        %392 = vmatpush1.bf16.msra.mxu0 0
        %393 = vmatprep.subr.bf16.mxu0 0
        %394 = vmatpush1.bf16.msra.mxu0 0
        %395 = vmatprep.subr.bf16.mxu0 0
        %396 = vmatpush1.bf16.msra.mxu0 0
        %397 = vmatprep.subr.bf16.mxu0 0
        %398 = vmatpush1.bf16.msra.mxu0 %v359
        %399 = vmatprep.subr.bf16.mxu0 0
        %400 = vmatpush1.bf16.msra.mxu0 %v358
        %401 = vmatprep.subr.bf16.mxu0 0
        %402 = vmatpush1.bf16.msra.mxu0 %v357
        %403 = vmatprep.subr.bf16.mxu0 0
        %404 = vmatpush1.bf16.msra.mxu0 %v356
        %405 = vmatprep.subr.bf16.mxu0 0
        %406 = vmatpush2.bf16.msra.mxu0 0
        %407 = vmatprep.subr.bf16.mxu0 0
        %408 = vmatpush2.bf16.msra.mxu0 0
        %409 = vmatprep.subr.bf16.mxu0 0
        %410 = vmatpush2.bf16.msra.mxu0 0
        %411 = vmatprep.subr.bf16.mxu0 0
        %412 = vmatpush2.bf16.msra.mxu0 0
        %413 = vmatprep.subr.bf16.mxu0 0
        %414 = vmatpush2.bf16.msra.mxu0 0
        %415 = vmatprep.subr.bf16.mxu0 0
        %416 = vmatpush2.bf16.msra.mxu0 0
        %417 = vmatprep.subr.bf16.mxu0 0
        %418 = vmatpush2.bf16.msra.mxu0 0
        %419 = vmatprep.subr.bf16.mxu0 0
        %420 = vmatpush2.bf16.msra.mxu0 0
        %421 = vmatprep.mubr.bf16.mxu0 0
        %422 = vmatmul.mubr.bf16.gmra.mxu0 %v366
        %v423 = vpop.f32.mrf.mxu0
        %v424 = vadd.f32 %v338, %v423
        %v425 = vpop.f32.mrf.mxu0
        %v426 = vpop.f32.mrf.mxu0
        %v427 = vadd.f32 %v338, %v426
        %v428 = vpop.f32.mrf.mxu0
        %429 = vmatprep.mubr.bf16.mxu0 0
        %430 = vmatmul.mubr.bf16.gmra.mxu0 %v369
        %v431 = vpop.f32.mrf.mxu0
        %v432 = vadd.f32 %v338, %v431
        %v433 = vpop.f32.mrf.mxu0
        %v434 = vpop.f32.mrf.mxu0
        %v435 = vadd.f32 %v338, %v434
        %v436 = vpop.f32.mrf.mxu0
        %437 = vmatprep.mubr.bf16.mxu0 0
        %438 = vmatmul.mubr.bf16.gmra.mxu0 %v372
        %v439 = vpop.f32.mrf.mxu0
        %v440 = vadd.f32 %v338, %v439
        %v441 = vpop.f32.mrf.mxu0
        %v442 = vpop.f32.mrf.mxu0
        %v443 = vadd.f32 %v338, %v442
        %v444 = vpop.f32.mrf.mxu0
        %445 = vmatprep.mubr.bf16.mxu0 0
        %446 = vmatmul.mubr.bf16.gmra.mxu0 %v375
        %v447 = vpop.f32.mrf.mxu0
        %v448 = vadd.f32 %v338, %v447
        %v449 = vpop.f32.mrf.mxu0
        %v450 = vpop.f32.mrf.mxu0
        %v451 = vadd.f32 %v338, %v450
        %v452 = vpop.f32.mrf.mxu0
        %453 = vmatprep.mubr.bf16.mxu0 0
        %454 = vmatmul.mubr.bf16.gmra.mxu0 %v378
        %v455 = vpop.f32.mrf.mxu0
        %v456 = vadd.f32 %v338, %v455
        %v457 = vpop.f32.mrf.mxu0
        %v458 = vpop.f32.mrf.mxu0
        %v459 = vadd.f32 %v338, %v458
        %v460 = vpop.f32.mrf.mxu0
        %461 = vmatprep.mubr.bf16.mxu0 0
        %462 = vmatmul.mubr.bf16.gmra.mxu0 %v381
        %v463 = vpop.f32.mrf.mxu0
        %v464 = vadd.f32 %v338, %v463
        %v465 = vpop.f32.mrf.mxu0
        %v466 = vpop.f32.mrf.mxu0
        %v467 = vadd.f32 %v338, %v466
        %v468 = vpop.f32.mrf.mxu0
        %469 = vmatprep.mubr.bf16.mxu0 0
        %470 = vmatmul.mubr.bf16.gmra.mxu0 %v384
        %v471 = vpop.f32.mrf.mxu0
        %v472 = vadd.f32 %v338, %v471
        %v473 = vpop.f32.mrf.mxu0
        %v474 = vpop.f32.mrf.mxu0
        %v475 = vadd.f32 %v338, %v474
        %v476 = vpop.f32.mrf.mxu0
        %477 = vmatprep.mubr.bf16.mxu0 0
        %478 = vmatmul.mubr.bf16.gmra.mxu0 %v387
        %v479 = vpop.f32.mrf.mxu0
        %v480 = vadd.f32 %v338, %v479
        %v481 = vpop.f32.mrf.mxu0
        %v482 = vpop.f32.mrf.mxu0
        %v483 = vadd.f32 %v338, %v482
        %v484 = vpop.f32.mrf.mxu0
        %485 = vdwg.mxu0
        %v486 = vmax.f32 %v424, 0.0
        %v487 = vmax.f32 %v427, 0.0
        %v488 = vmax.f32 %v432, 0.0
        %v489 = vmax.f32 %v435, 0.0
        %v490 = vmax.f32 %v440, 0.0
        %v491 = vmax.f32 %v443, 0.0
        %v492 = vmax.f32 %v448, 0.0
        %v493 = vmax.f32 %v451, 0.0
        %v494 = vmax.f32 %v456, 0.0
        %v495 = vmax.f32 %v459, 0.0
        %v496 = vmax.f32 %v464, 0.0
        %v497 = vmax.f32 %v467, 0.0
        %v498 = vmax.f32 %v472, 0.0
        %v499 = vmax.f32 %v475, 0.0
        %v500 = vmax.f32 %v480, 0.0
        %v501 = vmax.f32 %v483, 0.0
        %v502 = vpack.c.bf16 %v487, %v486
        %v503 = vpack.c.bf16 %v489, %v488
        %v504 = vpack.c.bf16 %v491, %v490
        %v505 = vpack.c.bf16 %v493, %v492
        %v506 = vpack.c.bf16 %v495, %v494
        %v507 = vpack.c.bf16 %v497, %v496
        %v508 = vpack.c.bf16 %v499, %v498
        %v509 = vpack.c.bf16 %v501, %v500
        %v510 = vld [vmem:[%s3] sm:$0xf]
        %v511 = vld [vmem:[%s3 + $0x4] sm:$0xf]
        %v512 = vld [vmem:[%s3 + $0x8] sm:$0xf]
        %v513 = vld [vmem:[%s3 + $0xc] sm:$0xf]
        %v514 = vld [vmem:[%s3 + $0x10] sm:$0xf]
        %v515 = vld [vmem:[%s3 + $0x14] sm:$0xf]
        %v516 = vld [vmem:[%s3 + $0x18] sm:$0xf]
        %v517 = vld [vmem:[%s3 + $0x1c] sm:$0xf]
        %v518 = vld [vmem:[%s3 + $0x20] sm:$0xf]
        %v519 = vld [vmem:[%s3 + $0x24] sm:$0xf]
        %v520 = vld [vmem:[%s3 + $0x28] sm:$0xf]
        %v521 = vld [vmem:[%s3 + $0x2c] sm:$0xf]
        %v522 = vld [vmem:[%s3 + $0x30] sm:$0xf]
        %v523 = vld [vmem:[%s3 + $0x34] sm:$0xf]
        %v524 = vld [vmem:[%s3 + $0x38] sm:$0xf]
        %v525 = vld [vmem:[%s3 + $0x3c] sm:$0xf]
        %v526 = vld [vmem:[%s4] sm:$0x1]
        %v528 = vlaneseq
        %v529 = vshrl.u32 %v528, 7
        %v530 = vsub.s32 0, %v529
        %v531 = vrot.slane %v526, %v530
        %v549 = vunpack.c.l.b16 %v510
        %v550 = vunpack.c.l.b16 %v511
        %v551 = vunpack.c.l.b16 %v512
        %v552 = vunpack.c.l.b16 %v513
        %v553 = vunpack.c.l.b16 %v514
        %v554 = vunpack.c.l.b16 %v515
        %v555 = vunpack.c.l.b16 %v516
        %v556 = vunpack.c.l.b16 %v517
        %v557 = vunpack.c.l.b16 %v518
        %v558 = vunpack.c.l.b16 %v519
        %v559 = vunpack.c.l.b16 %v520
        %v560 = vunpack.c.l.b16 %v521
        %v561 = vunpack.c.l.b16 %v522
        %v562 = vunpack.c.l.b16 %v523
        %v563 = vunpack.c.l.b16 %v524
        %v564 = vunpack.c.l.b16 %v525
        %v565 = vpack.c.b16 %v550, %v549
        %v566 = vpack.c.b16 %v552, %v551
        %v567 = vpack.c.b16 %v554, %v553
        %v568 = vpack.c.b16 %v556, %v555
        %v569 = vpack.c.b16 %v558, %v557
        %v570 = vpack.c.b16 %v560, %v559
        %v571 = vpack.c.b16 %v562, %v561
        %v572 = vpack.c.b16 %v564, %v563
        %581 = vmatprep.subr.bf16.mxu0 0
        %582 = vmatpush1.bf16.msra.mxu0 %v572
        %583 = vmatprep.subr.bf16.mxu0 0
        %584 = vmatpush1.bf16.msra.mxu0 %v571
        %585 = vmatprep.subr.bf16.mxu0 0
        %586 = vmatpush1.bf16.msra.mxu0 %v570
        %587 = vmatprep.subr.bf16.mxu0 0
        %588 = vmatpush1.bf16.msra.mxu0 %v569
        %589 = vmatprep.subr.bf16.mxu0 0
        %590 = vmatpush1.bf16.msra.mxu0 %v568
        %591 = vmatprep.subr.bf16.mxu0 0
        %592 = vmatpush1.bf16.msra.mxu0 %v567
        %593 = vmatprep.subr.bf16.mxu0 0
        %594 = vmatpush1.bf16.msra.mxu0 %v566
        %595 = vmatprep.subr.bf16.mxu0 0
        %596 = vmatpush1.bf16.msra.mxu0 %v565
        %597 = vmatprep.subr.bf16.mxu0 0
        %598 = vmatpush2.bf16.msra.mxu0 0
        %599 = vmatprep.subr.bf16.mxu0 0
        %600 = vmatpush2.bf16.msra.mxu0 0
        %601 = vmatprep.subr.bf16.mxu0 0
        %602 = vmatpush2.bf16.msra.mxu0 0
        %603 = vmatprep.subr.bf16.mxu0 0
        %604 = vmatpush2.bf16.msra.mxu0 0
        %605 = vmatprep.subr.bf16.mxu0 0
        %606 = vmatpush2.bf16.msra.mxu0 0
        %607 = vmatprep.subr.bf16.mxu0 0
        %608 = vmatpush2.bf16.msra.mxu0 0
        %609 = vmatprep.subr.bf16.mxu0 0
        %610 = vmatpush2.bf16.msra.mxu0 0
        %611 = vmatprep.subr.bf16.mxu0 0
        %612 = vmatpush2.bf16.msra.mxu0 0
        %613 = vmatprep.mubr.bf16.mxu0 0
        %614 = vmatmul.mubr.bf16.gmra.mxu0 %v502
        %v615 = vpop.f32.mrf.mxu0
        %v616 = vadd.f32 %v531, %v615
        %v617 = vpop.f32.mrf.mxu0
        %v618 = vpop.f32.mrf.mxu0
        %v619 = vadd.f32 %v531, %v618
        %v620 = vpop.f32.mrf.mxu0
        %621 = vmatprep.mubr.bf16.mxu0 0
        %622 = vmatmul.mubr.bf16.gmra.mxu0 %v503
        %v623 = vpop.f32.mrf.mxu0
        %v624 = vadd.f32 %v531, %v623
        %v625 = vpop.f32.mrf.mxu0
        %v626 = vpop.f32.mrf.mxu0
        %v627 = vadd.f32 %v531, %v626
        %v628 = vpop.f32.mrf.mxu0
        %629 = vmatprep.mubr.bf16.mxu0 0
        %630 = vmatmul.mubr.bf16.gmra.mxu0 %v504
        %v631 = vpop.f32.mrf.mxu0
        %v632 = vadd.f32 %v531, %v631
        %v633 = vpop.f32.mrf.mxu0
        %v634 = vpop.f32.mrf.mxu0
        %v635 = vadd.f32 %v531, %v634
        %v636 = vpop.f32.mrf.mxu0
        %637 = vmatprep.mubr.bf16.mxu0 0
        %638 = vmatmul.mubr.bf16.gmra.mxu0 %v505
        %v639 = vpop.f32.mrf.mxu0
        %v640 = vadd.f32 %v531, %v639
        %v641 = vpop.f32.mrf.mxu0
        %v642 = vpop.f32.mrf.mxu0
        %v643 = vadd.f32 %v531, %v642
        %v644 = vpop.f32.mrf.mxu0
        %645 = vmatprep.mubr.bf16.mxu0 0
        %646 = vmatmul.mubr.bf16.gmra.mxu0 %v506
        %v647 = vpop.f32.mrf.mxu0
        %v648 = vadd.f32 %v531, %v647
        %v649 = vpop.f32.mrf.mxu0
        %v650 = vpop.f32.mrf.mxu0
        %v651 = vadd.f32 %v531, %v650
        %v652 = vpop.f32.mrf.mxu0
        %653 = vmatprep.mubr.bf16.mxu0 0
        %654 = vmatmul.mubr.bf16.gmra.mxu0 %v507
        %v655 = vpop.f32.mrf.mxu0
        %v656 = vadd.f32 %v531, %v655
        %v657 = vpop.f32.mrf.mxu0
        %v658 = vpop.f32.mrf.mxu0
        %v659 = vadd.f32 %v531, %v658
        %v660 = vpop.f32.mrf.mxu0
        %661 = vmatprep.mubr.bf16.mxu0 0
        %662 = vmatmul.mubr.bf16.gmra.mxu0 %v508
        %v663 = vpop.f32.mrf.mxu0
        %v664 = vadd.f32 %v531, %v663
        %v665 = vpop.f32.mrf.mxu0
        %v666 = vpop.f32.mrf.mxu0
        %v667 = vadd.f32 %v531, %v666
        %v668 = vpop.f32.mrf.mxu0
        %669 = vmatprep.mubr.bf16.mxu0 0
        %670 = vmatmul.mubr.bf16.gmra.mxu0 %v509
        %v671 = vpop.f32.mrf.mxu0
        %v672 = vadd.f32 %v531, %v671
        %v673 = vpop.f32.mrf.mxu0
        %v674 = vpop.f32.mrf.mxu0
        %v675 = vadd.f32 %v531, %v674
        %v676 = vpop.f32.mrf.mxu0
        %677 = vdwg.mxu0
        %v678 = vmax.f32 %v616, 0.0
        %v679 = vmax.f32 %v619, 0.0
        %v680 = vmax.f32 %v624, 0.0
        %v681 = vmax.f32 %v627, 0.0
        %v682 = vmax.f32 %v632, 0.0
        %v683 = vmax.f32 %v635, 0.0
        %v684 = vmax.f32 %v640, 0.0
        %v685 = vmax.f32 %v643, 0.0
        %v686 = vmax.f32 %v648, 0.0
        %v687 = vmax.f32 %v651, 0.0
        %v688 = vmax.f32 %v656, 0.0
        %v689 = vmax.f32 %v659, 0.0
        %v690 = vmax.f32 %v664, 0.0
        %v691 = vmax.f32 %v667, 0.0
        %v692 = vmax.f32 %v672, 0.0
        %v693 = vmax.f32 %v675, 0.0
        %v694 = vpack.c.bf16 %v679, %v678
        %v695 = vpack.c.bf16 %v681, %v680
        %v696 = vpack.c.bf16 %v683, %v682
        %v697 = vpack.c.bf16 %v685, %v684
        %v698 = vpack.c.bf16 %v687, %v686
        %v699 = vpack.c.bf16 %v689, %v688
        %v700 = vpack.c.bf16 %v691, %v690
        %v701 = vpack.c.bf16 %v693, %v692
        %v702 = vld [vmem:[%s5] sm:$0xf]
        %v703 = vld [vmem:[%s5 + $0x4] sm:$0xf]
        %v704 = vld [vmem:[%s5 + $0x8] sm:$0xf]
        %v705 = vld [vmem:[%s5 + $0xc] sm:$0xf]
        %v706 = vld [vmem:[%s5 + $0x10] sm:$0xf]
        %v707 = vld [vmem:[%s5 + $0x14] sm:$0xf]
        %v708 = vld [vmem:[%s5 + $0x18] sm:$0xf]
        %v709 = vld [vmem:[%s5 + $0x1c] sm:$0xf]
        %v710 = vld [vmem:[%s5 + $0x20] sm:$0xf]
        %v711 = vld [vmem:[%s5 + $0x24] sm:$0xf]
        %v712 = vld [vmem:[%s5 + $0x28] sm:$0xf]
        %v713 = vld [vmem:[%s5 + $0x2c] sm:$0xf]
        %v714 = vld [vmem:[%s5 + $0x30] sm:$0xf]
        %v715 = vld [vmem:[%s5 + $0x34] sm:$0xf]
        %v716 = vld [vmem:[%s5 + $0x38] sm:$0xf]
        %v717 = vld [vmem:[%s5 + $0x3c] sm:$0xf]
        %v718 = vld [vmem:[%s6] sm:$0x1]
        %v720 = vlaneseq
        %v721 = vshrl.u32 %v720, 7
        %v722 = vsub.s32 0, %v721
        %v723 = vrot.slane %v718, %v722
        %v741 = vunpack.c.l.b16 %v702
        %v742 = vunpack.c.l.b16 %v703
        %v743 = vunpack.c.l.b16 %v704
        %v744 = vunpack.c.l.b16 %v705
        %v745 = vunpack.c.l.b16 %v706
        %v746 = vunpack.c.l.b16 %v707
        %v747 = vunpack.c.l.b16 %v708
        %v748 = vunpack.c.l.b16 %v709
        %v749 = vunpack.c.l.b16 %v710
        %v750 = vunpack.c.l.b16 %v711
        %v751 = vunpack.c.l.b16 %v712
        %v752 = vunpack.c.l.b16 %v713
        %v753 = vunpack.c.l.b16 %v714
        %v754 = vunpack.c.l.b16 %v715
        %v755 = vunpack.c.l.b16 %v716
        %v756 = vunpack.c.l.b16 %v717
        %v757 = vpack.c.b16 %v742, %v741
        %v758 = vpack.c.b16 %v744, %v743
        %v759 = vpack.c.b16 %v746, %v745
        %v760 = vpack.c.b16 %v748, %v747
        %v761 = vpack.c.b16 %v750, %v749
        %v762 = vpack.c.b16 %v752, %v751
        %v763 = vpack.c.b16 %v754, %v753
        %v764 = vpack.c.b16 %v756, %v755
        %773 = vmatprep.subr.bf16.mxu0 0
        %774 = vmatpush1.bf16.msra.mxu0 %v764
        %775 = vmatprep.subr.bf16.mxu0 0
        %776 = vmatpush1.bf16.msra.mxu0 %v763
        %777 = vmatprep.subr.bf16.mxu0 0
        %778 = vmatpush1.bf16.msra.mxu0 %v762
        %779 = vmatprep.subr.bf16.mxu0 0
        %780 = vmatpush1.bf16.msra.mxu0 %v761
        %781 = vmatprep.subr.bf16.mxu0 0
        %782 = vmatpush1.bf16.msra.mxu0 %v760
        %783 = vmatprep.subr.bf16.mxu0 0
        %784 = vmatpush1.bf16.msra.mxu0 %v759
        %785 = vmatprep.subr.bf16.mxu0 0
        %786 = vmatpush1.bf16.msra.mxu0 %v758
        %787 = vmatprep.subr.bf16.mxu0 0
        %788 = vmatpush1.bf16.msra.mxu0 %v757
        %789 = vmatprep.subr.bf16.mxu0 0
        %790 = vmatpush2.bf16.msra.mxu0 0
        %791 = vmatprep.subr.bf16.mxu0 0
        %792 = vmatpush2.bf16.msra.mxu0 0
        %793 = vmatprep.subr.bf16.mxu0 0
        %794 = vmatpush2.bf16.msra.mxu0 0
        %795 = vmatprep.subr.bf16.mxu0 0
        %796 = vmatpush2.bf16.msra.mxu0 0
        %797 = vmatprep.subr.bf16.mxu0 0
        %798 = vmatpush2.bf16.msra.mxu0 0
        %799 = vmatprep.subr.bf16.mxu0 0
        %800 = vmatpush2.bf16.msra.mxu0 0
        %801 = vmatprep.subr.bf16.mxu0 0
        %802 = vmatpush2.bf16.msra.mxu0 0
        %803 = vmatprep.subr.bf16.mxu0 0
        %804 = vmatpush2.bf16.msra.mxu0 0
        %805 = vmatprep.mubr.bf16.mxu0 0
        %806 = vmatmul.mubr.bf16.gmra.mxu0 %v694
        %v807 = vpop.f32.mrf.mxu0
        %v808 = vadd.f32 %v723, %v807
        %v809 = vpop.f32.mrf.mxu0
        %v810 = vpop.f32.mrf.mxu0
        %v811 = vadd.f32 %v723, %v810
        %v812 = vpop.f32.mrf.mxu0
        %813 = vmatprep.mubr.bf16.mxu0 0
        %814 = vmatmul.mubr.bf16.gmra.mxu0 %v695
        %v815 = vpop.f32.mrf.mxu0
        %v816 = vadd.f32 %v723, %v815
        %v817 = vpop.f32.mrf.mxu0
        %v818 = vpop.f32.mrf.mxu0
        %v819 = vadd.f32 %v723, %v818
        %v820 = vpop.f32.mrf.mxu0
        %821 = vmatprep.mubr.bf16.mxu0 0
        %822 = vmatmul.mubr.bf16.gmra.mxu0 %v696
        %v823 = vpop.f32.mrf.mxu0
        %v824 = vadd.f32 %v723, %v823
        %v825 = vpop.f32.mrf.mxu0
        %v826 = vpop.f32.mrf.mxu0
        %v827 = vadd.f32 %v723, %v826
        %v828 = vpop.f32.mrf.mxu0
        %829 = vmatprep.mubr.bf16.mxu0 0
        %830 = vmatmul.mubr.bf16.gmra.mxu0 %v697
        %v831 = vpop.f32.mrf.mxu0
        %v832 = vadd.f32 %v723, %v831
        %v833 = vpop.f32.mrf.mxu0
        %v834 = vpop.f32.mrf.mxu0
        %v835 = vadd.f32 %v723, %v834
        %v836 = vpop.f32.mrf.mxu0
        %837 = vmatprep.mubr.bf16.mxu0 0
        %838 = vmatmul.mubr.bf16.gmra.mxu0 %v698
        %v839 = vpop.f32.mrf.mxu0
        %v840 = vadd.f32 %v723, %v839
        %v841 = vpop.f32.mrf.mxu0
        %v842 = vpop.f32.mrf.mxu0
        %v843 = vadd.f32 %v723, %v842
        %v844 = vpop.f32.mrf.mxu0
        %845 = vmatprep.mubr.bf16.mxu0 0
        %846 = vmatmul.mubr.bf16.gmra.mxu0 %v699
        %v847 = vpop.f32.mrf.mxu0
        %v848 = vadd.f32 %v723, %v847
        %v849 = vpop.f32.mrf.mxu0
        %v850 = vpop.f32.mrf.mxu0
        %v851 = vadd.f32 %v723, %v850
        %v852 = vpop.f32.mrf.mxu0
        %853 = vmatprep.mubr.bf16.mxu0 0
        %854 = vmatmul.mubr.bf16.gmra.mxu0 %v700
        %v855 = vpop.f32.mrf.mxu0
        %v856 = vadd.f32 %v723, %v855
        %v857 = vpop.f32.mrf.mxu0
        %v858 = vpop.f32.mrf.mxu0
        %v859 = vadd.f32 %v723, %v858
        %v860 = vpop.f32.mrf.mxu0
        %861 = vmatprep.mubr.bf16.mxu0 0
        %862 = vmatmul.mubr.bf16.gmra.mxu0 %v701
        %v863 = vpop.f32.mrf.mxu0
        %v864 = vadd.f32 %v723, %v863
        %v865 = vpop.f32.mrf.mxu0
        %v866 = vpop.f32.mrf.mxu0
        %v867 = vadd.f32 %v723, %v866
        %v868 = vpop.f32.mrf.mxu0
        %869 = vdwg.mxu0
        %vm870 = vcmask 64512
        %871 = vst.msk [vmem:[%s280] sm:$0xff] %vm870, %v808
        %872 = vst.msk [vmem:[%s280 + $0x8] sm:$0xff] %vm870, %v811
        %873 = vst.msk [vmem:[%s280 + $0x10] sm:$0xff] %vm870, %v816
        %874 = vst.msk [vmem:[%s280 + $0x18] sm:$0xff] %vm870, %v819
        %875 = vst.msk [vmem:[%s280 + $0x20] sm:$0xff] %vm870, %v824
        %876 = vst.msk [vmem:[%s280 + $0x28] sm:$0xff] %vm870, %v827
        %877 = vst.msk [vmem:[%s280 + $0x30] sm:$0xff] %vm870, %v832
        %878 = vst.msk [vmem:[%s280 + $0x38] sm:$0xff] %vm870, %v835
        %879 = vst.msk [vmem:[%s280 + $0x40] sm:$0xff] %vm870, %v840
        %880 = vst.msk [vmem:[%s280 + $0x48] sm:$0xff] %vm870, %v843
        %881 = vst.msk [vmem:[%s280 + $0x50] sm:$0xff] %vm870, %v848
        %882 = vst.msk [vmem:[%s280 + $0x58] sm:$0xff] %vm870, %v851
        %883 = vst.msk [vmem:[%s280 + $0x60] sm:$0xff] %vm870, %v856
        %884 = vst.msk [vmem:[%s280 + $0x68] sm:$0xff] %vm870, %v859
        %885 = vst.msk [vmem:[%s280 + $0x70] sm:$0xff] %vm870, %v864
        %886 = vst.msk [vmem:[%s280 + $0x78] sm:$0xff] %vm870, %v867
        %s887 = sand.u32 %s178, 1
        %s888 = sand.u32 %s178, 1
        %s889 = smul.addr %s888, 128
        %s890 = scalar_lea.vmem [#allocation2], %s889
        // Predicated region
        $region49: #{tpu_custom_call.1} parent=47 // pred_check
          %p891 = pneg %p188
        $region50: #{tpu_custom_call.1} parent=47 // pred_check_branch
          %893 = sbr.rel (%p891) target = $region52
        $region51: #{tpu_custom_call.1} parent=47 // pred_region
          %s894 = smul.u32 16, %s18
          %s895 = ssub.s32 25, %s894
          %p896 = scmp.lt.s32.totalorder %s895, 16
          %s897 = scalar_select %p896, %s895, 16
          %s898 = smul.u32 128, %s897
          %p899 = scmp.ne.s32.totalorder 0, %s898
          %s900 = smul.addr %s894, 8
          %s901 = scalar_lea.vmem %s7, %s900
          // Predicated region
          $region53: #{tpu_custom_call.1} parent=51 // pred_check
            %p902 = pneg %p899
          $region54: #{tpu_custom_call.1} parent=51 // pred_check_branch
            %904 = sbr.rel (%p902) target = $region56
          $region55: #{tpu_custom_call.1} parent=51 // pred_region
            // Predicated region
            $region57: #{tpu_custom_call.1} parent=55 // pred_check
              _
            $region58: #{tpu_custom_call.1} parent=55 // pred_check_branch
              %906 = sbr.rel (0) target = $region60
            $region59: #{tpu_custom_call.1} parent=55 // pred_region
              // Predicated region
              $region79: #{tpu_custom_call.1} parent=59 // pred_check
                _
              $region80: #{tpu_custom_call.1} parent=59 // pred_check_branch
                %986 = sbr.rel (0) target = $region82
              $region81: #{tpu_custom_call.1} parent=59 // pred_region
                %s987 = sshrl.u32 %s897, 4
                // While loop
                $region83: #{tpu_custom_call.1} parent=81 // loop_pre_header
                  _
                $region84: #{tpu_custom_call.1} parent=81 // loop_header
                  %s989 = sphi 0, %s991
                  %p990 = scmp.ge.s32.totalorder %s989, %s987
                  %s994 = sphi 0, %s1031
                  %s995 = sphi %s890, %s1034
                  %s996 = sphi %s901, %s1035
                $region85: #{tpu_custom_call.1} parent=81 // loop_header_branch
                  %993 = sbr.rel (%p990) target = $region89
                $region86: #{tpu_custom_call.1} parent=81 // loop_body
                  %v997 = vld [vmem:[%s995] sm:$0xff]
                  %998 = vst [vmem:[%s996] sm:$0xff] %v997
                  %v999 = vld [vmem:[%s995 + $0x8] sm:$0xff]
                  %1000 = vst [vmem:[%s996 + $0x8] sm:$0xff] %v999
                  %v1001 = vld [vmem:[%s995 + $0x10] sm:$0xff]
                  %1002 = vst [vmem:[%s996 + $0x10] sm:$0xff] %v1001
                  %v1003 = vld [vmem:[%s995 + $0x18] sm:$0xff]
                  %1004 = vst [vmem:[%s996 + $0x18] sm:$0xff] %v1003
                  %v1005 = vld [vmem:[%s995 + $0x20] sm:$0xff]
                  %1006 = vst [vmem:[%s996 + $0x20] sm:$0xff] %v1005
                  %v1007 = vld [vmem:[%s995 + $0x28] sm:$0xff]
                  %1008 = vst [vmem:[%s996 + $0x28] sm:$0xff] %v1007
                  %v1009 = vld [vmem:[%s995 + $0x30] sm:$0xff]
                  %1010 = vst [vmem:[%s996 + $0x30] sm:$0xff] %v1009
                  %v1011 = vld [vmem:[%s995 + $0x38] sm:$0xff]
                  %1012 = vst [vmem:[%s996 + $0x38] sm:$0xff] %v1011
                  %v1013 = vld [vmem:[%s995 + $0x40] sm:$0xff]
                  %1014 = vst [vmem:[%s996 + $0x40] sm:$0xff] %v1013
                  %v1015 = vld [vmem:[%s995 + $0x48] sm:$0xff]
                  %1016 = vst [vmem:[%s996 + $0x48] sm:$0xff] %v1015
                  %v1017 = vld [vmem:[%s995 + $0x50] sm:$0xff]
                  %1018 = vst [vmem:[%s996 + $0x50] sm:$0xff] %v1017
                  %v1019 = vld [vmem:[%s995 + $0x58] sm:$0xff]
                  %1020 = vst [vmem:[%s996 + $0x58] sm:$0xff] %v1019
                  %v1021 = vld [vmem:[%s995 + $0x60] sm:$0xff]
                  %1022 = vst [vmem:[%s996 + $0x60] sm:$0xff] %v1021
                  %v1023 = vld [vmem:[%s995 + $0x68] sm:$0xff]
                  %1024 = vst [vmem:[%s996 + $0x68] sm:$0xff] %v1023
                  %v1025 = vld [vmem:[%s995 + $0x70] sm:$0xff]
                  %1026 = vst [vmem:[%s996 + $0x70] sm:$0xff] %v1025
                  %v1027 = vld [vmem:[%s995 + $0x78] sm:$0xff]
                  %1028 = vst [vmem:[%s996 + $0x78] sm:$0xff] %v1027
                  %s1029 = sadd.s32 1, %s994
                  %p1030 = scmp.ge.s32.totalorder %s1029, %s987
                  %s1031 = scalar_select %p1030, 0, %s1029
                  %s1032 = smul.u32 %s1031, 128
                  %s1033 = smul.u32 %s1031, 128
                  %s1034 = scalar_lea.vmem %s890, %s1032 [#allocation2]
                  %s1035 = scalar_lea.vmem %s901, %s1033
                $region87: #{tpu_custom_call.1} parent=81 // loop_footer
                  %s991 = sadd.s32 %s989, 1
                $region88: #{tpu_custom_call.1} parent=81 // loop_footer_branch
                  %988 = sbr.rel target = $region84
                $region89: #{tpu_custom_call.1} parent=81 // loop_exit
                  _
                %s1036 = sshrl.u32 %s897, 4
                %s1037 = sand.u32 %s897, 15
                %s1038 = smul.u32 %s1036, 16
                %s1039 = smul.u32 8, %s1038
                %s1040 = scalar_lea.vmem %s890, %s1039 [#allocation2]
                %s1041 = smul.u32 8, %s1038
                %s1042 = scalar_lea.vmem %s901, %s1041
                // While loop
                $region90: #{tpu_custom_call.1} parent=81 // loop_pre_header
                  _
                $region91: #{tpu_custom_call.1} parent=81 // loop_header
                  %s1044 = sphi 0, %s1046
                  %p1045 = scmp.ge.s32.totalorder %s1044, %s1037
                  %s1049 = sphi 0, %s1056
                  %s1050 = sphi %s1040, %s1059
                  %s1051 = sphi %s1042, %s1060
                $region92: #{tpu_custom_call.1} parent=81 // loop_header_branch
                  %1048 = sbr.rel (%p1045) target = $region96
                $region93: #{tpu_custom_call.1} parent=81 // loop_body
                  %v1052 = vld [vmem:[%s1050] sm:$0xff]
                  %1053 = vst [vmem:[%s1051] sm:$0xff] %v1052
                  %s1054 = sadd.s32 1, %s1049
                  %p1055 = scmp.ge.s32.totalorder %s1054, %s1037
                  %s1056 = scalar_select %p1055, 0, %s1054
                  %s1057 = smul.u32 %s1056, 8
                  %s1058 = smul.u32 %s1056, 8
                  %s1059 = scalar_lea.vmem %s1040, %s1057 [#allocation2]
                  %s1060 = scalar_lea.vmem %s1042, %s1058
                $region94: #{tpu_custom_call.1} parent=81 // loop_footer
                  %s1046 = sadd.s32 %s1044, 1
                $region95: #{tpu_custom_call.1} parent=81 // loop_footer_branch
                  %1043 = sbr.rel target = $region91
                $region96: #{tpu_custom_call.1} parent=81 // loop_exit
                  _
              $region82: #{tpu_custom_call.1} parent=59 // pred_fallthru
                _
              // Predicated region
              $region97: #{tpu_custom_call.1} parent=59 // pred_check
                _
              $region98: #{tpu_custom_call.1} parent=59 // pred_check_branch
                %1062 = sbr.rel target = $region100
              $region99: #{tpu_custom_call.1} parent=59 // pred_region
                _
              $region100: #{tpu_custom_call.1} parent=59 // pred_fallthru
                _
            $region60: #{tpu_custom_call.1} parent=55 // pred_fallthru
              _
            // Predicated region
            $region61: #{tpu_custom_call.1} parent=55 // pred_check
              _
            $region62: #{tpu_custom_call.1} parent=55 // pred_check_branch
              %908 = sbr.rel target = $region64
            $region63: #{tpu_custom_call.1} parent=55 // pred_region
              %s910 = ssub.s32 256, 1
              %s911 = sshrl.u32 %s897, 4
              // While loop
              $region65: #{tpu_custom_call.1} parent=63 // loop_pre_header
                _
              $region66: #{tpu_custom_call.1} parent=63 // loop_header
                %s913 = sphi 0, %s915
                %p914 = scmp.ge.s32.totalorder %s913, %s911
                %s918 = sphi 0, %s955
                %s919 = sphi %s890, %s958
                %s920 = sphi %s901, %s959
              $region67: #{tpu_custom_call.1} parent=63 // loop_header_branch
                %917 = sbr.rel (%p914) target = $region71
              $region68: #{tpu_custom_call.1} parent=63 // loop_body
                %v921 = vld [vmem:[%s919] sm:%s910]
                %922 = vst [vmem:[%s920] sm:%s910] %v921
                %v923 = vld [vmem:[%s919 + $0x8] sm:%s910]
                %924 = vst [vmem:[%s920 + $0x8] sm:%s910] %v923
                %v925 = vld [vmem:[%s919 + $0x10] sm:%s910]
                %926 = vst [vmem:[%s920 + $0x10] sm:%s910] %v925
                %v927 = vld [vmem:[%s919 + $0x18] sm:%s910]
                %928 = vst [vmem:[%s920 + $0x18] sm:%s910] %v927
                %v929 = vld [vmem:[%s919 + $0x20] sm:%s910]
                %930 = vst [vmem:[%s920 + $0x20] sm:%s910] %v929
                %v931 = vld [vmem:[%s919 + $0x28] sm:%s910]
                %932 = vst [vmem:[%s920 + $0x28] sm:%s910] %v931
                %v933 = vld [vmem:[%s919 + $0x30] sm:%s910]
                %934 = vst [vmem:[%s920 + $0x30] sm:%s910] %v933
                %v935 = vld [vmem:[%s919 + $0x38] sm:%s910]
                %936 = vst [vmem:[%s920 + $0x38] sm:%s910] %v935
                %v937 = vld [vmem:[%s919 + $0x40] sm:%s910]
                %938 = vst [vmem:[%s920 + $0x40] sm:%s910] %v937
                %v939 = vld [vmem:[%s919 + $0x48] sm:%s910]
                %940 = vst [vmem:[%s920 + $0x48] sm:%s910] %v939
                %v941 = vld [vmem:[%s919 + $0x50] sm:%s910]
                %942 = vst [vmem:[%s920 + $0x50] sm:%s910] %v941
                %v943 = vld [vmem:[%s919 + $0x58] sm:%s910]
                %944 = vst [vmem:[%s920 + $0x58] sm:%s910] %v943
                %v945 = vld [vmem:[%s919 + $0x60] sm:%s910]
                %946 = vst [vmem:[%s920 + $0x60] sm:%s910] %v945
                %v947 = vld [vmem:[%s919 + $0x68] sm:%s910]
                %948 = vst [vmem:[%s920 + $0x68] sm:%s910] %v947
                %v949 = vld [vmem:[%s919 + $0x70] sm:%s910]
                %950 = vst [vmem:[%s920 + $0x70] sm:%s910] %v949
                %v951 = vld [vmem:[%s919 + $0x78] sm:%s910]
                %952 = vst [vmem:[%s920 + $0x78] sm:%s910] %v951
                %s953 = sadd.s32 1, %s918
                %p954 = scmp.ge.s32.totalorder %s953, %s911
                %s955 = scalar_select %p954, 0, %s953
                %s956 = smul.u32 %s955, 128
                %s957 = smul.u32 %s955, 128
                %s958 = scalar_lea.vmem %s890, %s956 [#allocation2]
                %s959 = scalar_lea.vmem %s901, %s957
              $region69: #{tpu_custom_call.1} parent=63 // loop_footer
                %s915 = sadd.s32 %s913, 1
              $region70: #{tpu_custom_call.1} parent=63 // loop_footer_branch
                %912 = sbr.rel target = $region66
              $region71: #{tpu_custom_call.1} parent=63 // loop_exit
                _
              %s960 = sshrl.u32 %s897, 4
              %s961 = sand.u32 %s897, 15
              %s962 = smul.u32 %s960, 16
              %s963 = smul.u32 8, %s962
              %s964 = scalar_lea.vmem %s890, %s963 [#allocation2]
              %s965 = smul.u32 8, %s962
              %s966 = scalar_lea.vmem %s901, %s965
              // While loop
              $region72: #{tpu_custom_call.1} parent=63 // loop_pre_header
                _
              $region73: #{tpu_custom_call.1} parent=63 // loop_header
                %s968 = sphi 0, %s970
                %p969 = scmp.ge.s32.totalorder %s968, %s961
                %s973 = sphi 0, %s980
                %s974 = sphi %s964, %s983
                %s975 = sphi %s966, %s984
              $region74: #{tpu_custom_call.1} parent=63 // loop_header_branch
                %972 = sbr.rel (%p969) target = $region78
              $region75: #{tpu_custom_call.1} parent=63 // loop_body
                %v976 = vld [vmem:[%s974] sm:%s910]
                %977 = vst [vmem:[%s975] sm:%s910] %v976
                %s978 = sadd.s32 1, %s973
                %p979 = scmp.ge.s32.totalorder %s978, %s961
                %s980 = scalar_select %p979, 0, %s978
                %s981 = smul.u32 %s980, 8
                %s982 = smul.u32 %s980, 8
                %s983 = scalar_lea.vmem %s964, %s981 [#allocation2]
                %s984 = scalar_lea.vmem %s966, %s982
              $region76: #{tpu_custom_call.1} parent=63 // loop_footer
                %s970 = sadd.s32 %s968, 1
              $region77: #{tpu_custom_call.1} parent=63 // loop_footer_branch
                %967 = sbr.rel target = $region73
              $region78: #{tpu_custom_call.1} parent=63 // loop_exit
                _
            $region64: #{tpu_custom_call.1} parent=55 // pred_fallthru
              _
          $region56: #{tpu_custom_call.1} parent=51 // pred_fallthru
            _
          %1063 = vnop
        $region52: #{tpu_custom_call.1} parent=47 // pred_fallthru
          _
      $region48: #{tpu_custom_call.1} parent=5 // pred_fallthru
        _
      %p1064 = scmp.le.s32.totalorder 2, %s13
      // Predicated region
      $region101: #{tpu_custom_call.1} parent=5 // pred_check
        %p1065 = pneg %p1064
      $region102: #{tpu_custom_call.1} parent=5 // pred_check_branch
        %1067 = sbr.rel (%p1065) target = $region104
      $region103: #{tpu_custom_call.1} parent=5 // pred_region
        %s1068 = ssub.s32 %s13, 2
        // Predicated region
        $region105: #{tpu_custom_call.1} parent=103 // pred_check
          %p1069 = pneg %p194
        $region106: #{tpu_custom_call.1} parent=103 // pred_check_branch
          %1071 = sbr.rel (%p1069) target = $region108
        $region107: #{tpu_custom_call.1} parent=103 // pred_region
          %s1072 = sand.u32 %s179, 1
          %s1073 = sand.u32 %s179, 1
          %s1074 = smul.addr %s1073, 128
          %s1075 = scalar_lea.vmem [#allocation2], %s1074
        $region108: #{tpu_custom_call.1} parent=103 // pred_fallthru
          _
      $region104: #{tpu_custom_call.1} parent=5 // pred_fallthru
        _
    $region6: #{tpu_custom_call.1} parent=1 // loop_footer
      %s17 = sadd.s32 1, %s13
    $region7: #{tpu_custom_call.1} parent=1 // loop_footer_branch
      %12 = sbr.rel target = $region3
    $region8: #{tpu_custom_call.1} parent=1 // loop_exit
      _

</llo_original>
